<compile_context>
chip_gen: v6e
topology: v6e:2x2x1
jax: 0.10.0
libtpu: 0.0.40
codegen_flags: <defaults>
</compile_context>

<pallas_src>
import jax
import jax.numpy as jnp
from jax import lax
from jax.experimental import pallas as pl
from jax.experimental.pallas import tpu as pltpu

# Contract dim 1 of LHS with dim 1 of RHS  ==  lhs @ rhs.T  (no batch dims).
_NT_DIMS = (((1,), (1,)), ((), ()))


def _adapter_kernel(x_ref, w1_ref, w2_ref, o_ref):
    # x_ref:  (tm, C)  block of input rows (compute dtype, e.g. bf16)
    # w1_ref: (H, C)   first nn.Linear weight, PyTorch (out, in) layout
    # w2_ref: (C, H)   second nn.Linear weight, PyTorch (out, in) layout
    # o_ref:  (tm, C)  output block
    x = x_ref[...]

    # h = ReLU(x @ W1^T), fp32 accumulation on the MXU.
    h = lax.dot_general(x, w1_ref[...], dimension_numbers=_NT_DIMS,
                        preferred_element_type=jnp.float32)
    h = jnp.maximum(h, 0.0)                                   # ReLU(inplace=True)

    # y = ReLU(h @ W2^T); feed the MXU in the weight dtype, accumulate fp32.
    y = lax.dot_general(h.astype(w2_ref.dtype), w2_ref[...],
                        dimension_numbers=_NT_DIMS,
                        preferred_element_type=jnp.float32)
    y = jnp.maximum(y, 0.0)                                   # ReLU(inplace=True)

    o_ref[...] = y.astype(o_ref.dtype)


def adapter_ns_forward(x, w1, w2, *, block_rows=None,
                       compute_dtype=jnp.bfloat16, out_dtype=None):
    """Pallas forward for Adapter_ns.

    x:  (N, C)   input rows
    w1: (H, C)   first nn.Linear weight  (PyTorch layout: out_features x in_features)
    w2: (C, H)   second nn.Linear weight
    """
    N, C = x.shape
    H = w1.shape[0]
    assert w1.shape == (H, C) and w2.shape == (C, H)
    out_dtype = out_dtype or x.dtype

    # bf16 compute dtype by default (MXU-native, halves HBM/VMEM bytes).
    # In a real deployment the activations/weights would already live in bf16;
    # the casts here are one-time glue.
    if compute_dtype is not None:
        x = x.astype(compute_dtype)
        w1 = w1.astype(compute_dtype)
        w2 = w2.astype(compute_dtype)

    # Row tiling: keep tiles MXU-friendly (multiple of 128) and the grid >= 2
    # steps whenever the problem allows, so x/out are pipelined (double
    # buffered) and v7x can shard rows across its 2 TensorCores.
    if block_rows is None:
        if N >= 512:
            block_rows = 256
        elif N >= 256:
            block_rows = 128
        else:
            block_rows = N          # tiny problems: single block over all rows
    grid = (pl.cdiv(N, block_rows),)

    in_bytes = jnp.dtype(x.dtype).itemsize
    w_bytes = jnp.dtype(w1.dtype).itemsize
    out_bytes = jnp.dtype(out_dtype).itemsize

    # VMEM budget: double-buffered x and out tiles + double-buffered resident
    # weights (weight block index never changes, but default buffering is 2).
    need = (2 * block_rows * C * in_bytes
            + 2 * block_rows * C * out_bytes
            + 2 * 2 * C * H * w_bytes)
    # Floor at the common 32 MiB default, cap comfortably under v7x's 64 MiB.
    vmem_limit = min(max(int(1.25 * need) + (4 << 20), 32 << 20), 56 << 20)
    # TODO(synk): for very large C on v7x, also tile W2^T's output-column dim
    # (second grid axis) or drop weight buffering to 1 to stay under 64 MiB.

    cost = pl.CostEstimate(
        flops=4 * N * C * H,                # two N x C x H matmuls
        transcendentals=0,
        bytes_accessed=N * C * (in_bytes + out_bytes) + 2 * C * H * w_bytes)

    return pl.pallas_call(
        _adapter_kernel,
        out_shape=jax.ShapeDtypeStruct((N, C), out_dtype),
        grid_spec=pltpu.PrefetchScalarGridSpec(
            num_scalar_prefetch=0,
            grid=grid,
            in_specs=[
                pl.BlockSpec((block_rows, C), lambda i: (i, 0)),  # x row tile
                pl.BlockSpec((H, C), lambda i: (0, 0)),           # W1 resident
                pl.BlockSpec((C, H), lambda i: (0, 0)),           # W2 resident
            ],
            out_specs=pl.BlockSpec((block_rows, C), lambda i: (i, 0)),
        ),
        compiler_params=pltpu.CompilerParams(
            dimension_semantics=("parallel",),
            vmem_limit_bytes=vmem_limit),
        cost_estimate=cost,
    )(x, w1, w2)


def _reference(x, w1, w2, *, compute_dtype=None):
    """Pure-JAX reference; compute_dtype mirrors the kernel's matmul dtype."""
    if compute_dtype is not None:
        x = x.astype(compute_dtype)
        w1 = w1.astype(compute_dtype)
        w2 = w2.astype(compute_dtype)
    h = jnp.maximum(jnp.dot(x, w1.T, preferred_element_type=jnp.float32), 0.0)
    h = h.astype(w2.dtype)
    y = jnp.maximum(jnp.dot(h, w2.T, preferred_element_type=jnp.float32), 0.0)
    return y.astype(jnp.float32)


if __name__ == "__main__":
    # Small but lane/MXU-friendly shapes: c_in=128, reduction=4 -> hidden=32,
    # N=256 rows -> block_rows=128, grid=(2,) (pipelined, megacore-shardable).
    N, C, RED = 256, 128, 4
    H = C // RED

    key = jax.random.PRNGKey(0)
    kx, k1, k2 = jax.random.split(key, 3)

    x = jax.random.normal(kx, (N, C), dtype=jnp.float32)
    # Deterministic synthetic weights (PyTorch nn.Linear layout: out x in).
    bound1 = 1.0 / jnp.sqrt(C)
    bound2 = 1.0 / jnp.sqrt(H)
    w1 = jax.random.uniform(k1, (H, C), minval=-bound1, maxval=bound1,
                            dtype=jnp.float32)
    w2 = jax.random.uniform(k2, (C, H), minval=-bound2, maxval=bound2,
                            dtype=jnp.float32)

    out = adapter_ns_forward(x, w1, w2)
    out = jax.block_until_ready(out)
    assert out.shape == (N, C) and out.dtype == x.dtype

    # Strict check vs a reference using the same compute dtype (bf16 matmuls,
    # fp32 accumulation).
    ref_bf16 = _reference(x, w1, w2, compute_dtype=jnp.bfloat16)
    assert jnp.allclose(out, ref_bf16, atol=5e-3, rtol=5e-3), \
        "mismatch vs bf16-matched reference"

    # Loose sanity check vs pure-fp32 PyTorch semantics (bf16 rounding only).
    ref_f32 = _reference(x, w1, w2, compute_dtype=None)
    assert jnp.allclose(out, ref_f32, atol=1.5e-1, rtol=1e-1), \
        "mismatch vs fp32 reference beyond bf16 tolerance"

    print("KERNEL_OK")
</pallas_src>

<mosaic_0001>
module attributes {stable_mosaic.version = 11 : i64} {
  func.func @_adapter_kernel(%arg0: i32, %arg1: memref<128x128xbf16, #tpu.memory_space<vmem>>, %arg2: memref<32x128xbf16, #tpu.memory_space<vmem>>, %arg3: memref<128x32xbf16, #tpu.memory_space<vmem>>, %arg4: memref<128x128xf32, #tpu.memory_space<vmem>>) attributes {dimension_semantics = [#tpu.dimension_semantics<parallel>], iteration_bounds = array<i64: 2>, scalar_prefetch = 0 : i64, scratch_operands = 0 : i64, tpu.core_type = #tpu.core_type<tc>, window_params = [{transform_indices = @transform_0, window_bounds = array<i64: 128, 128>}, {pipeline_mode = #tpu.pipeline_mode<synchronous>, transform_indices = @transform_1, window_bounds = array<i64: 32, 128>}, {pipeline_mode = #tpu.pipeline_mode<synchronous>, transform_indices = @transform_2, window_bounds = array<i64: 128, 32>}, {transform_indices = @transform_3, window_bounds = array<i64: 128, 128>}]} {
    %c0 = arith.constant 0 : index
    %c0_0 = arith.constant 0 : index
    %0 = vector.load %arg1[%c0, %c0_0] : memref<128x128xbf16, #tpu.memory_space<vmem>>, vector<128x128xbf16>
    %c0_1 = arith.constant 0 : index
    %c0_2 = arith.constant 0 : index
    %1 = vector.load %arg2[%c0_1, %c0_2] : memref<32x128xbf16, #tpu.memory_space<vmem>>, vector<32x128xbf16>
    %cst = arith.constant dense<0.000000e+00> : vector<128x32xf32>
    %2 = tpu.matmul %0, %1, %cst {dimension_numbers = #tpu.dot_dimension_numbers<[1], [1], [0], [0], [0, 0, 1, 0], [], []>} : vector<128x128xbf16>, vector<32x128xbf16>, vector<128x32xf32> -> vector<128x32xf32>
    %cst_3 = arith.constant 0.000000e+00 : f32
    %3 = vector.broadcast %cst_3 : f32 to vector<128x32xf32>
    %4 = arith.maximumf %2, %3 : vector<128x32xf32>
    %5 = arith.truncf %4 : vector<128x32xf32> to vector<128x32xbf16>
    %c0_4 = arith.constant 0 : index
    %c0_5 = arith.constant 0 : index
    %6 = vector.load %arg3[%c0_4, %c0_5] : memref<128x32xbf16, #tpu.memory_space<vmem>>, vector<128x32xbf16>
    %cst_6 = arith.constant dense<0.000000e+00> : vector<128x128xf32>
    %7 = tpu.matmul %5, %6, %cst_6 {dimension_numbers = #tpu.dot_dimension_numbers<[1], [1], [0], [0], [0, 0, 1, 0], [], []>} : vector<128x32xbf16>, vector<128x32xbf16>, vector<128x128xf32> -> vector<128x128xf32>
    %cst_7 = arith.constant 0.000000e+00 : f32
    %8 = vector.broadcast %cst_7 : f32 to vector<128x128xf32>
    %9 = arith.maximumf %7, %8 : vector<128x128xf32>
    %c0_8 = arith.constant 0 : index
    %c0_9 = arith.constant 0 : index
    %10 = vector.load %arg4[%c0_8, %c0_9] : memref<128x128xf32, #tpu.memory_space<vmem>>, vector<128x128xf32>
    tpu.vector_store %arg4[%c0_8, %c0_9], %9 {strides = array<i32>} : memref<128x128xf32, #tpu.memory_space<vmem>>, vector<128x128xf32>,
    return
  }
  func.func @transform_0(%arg0: i32) -> (i32, i32) {
    %c0_i32 = arith.constant 0 : i32
    %c0_i32_0 = arith.constant 0 : i32
    return %arg0, %c0_i32 : i32, i32
  }
  func.func @transform_1(%arg0: i32) -> (i32, i32) {
    %c0_i32 = arith.constant 0 : i32
    %c0_i32_0 = arith.constant 0 : i32
    %c0_i32_1 = arith.constant 0 : i32
    return %c0_i32, %c0_i32_0 : i32, i32
  }
  func.func @transform_2(%arg0: i32) -> (i32, i32) {
    %c0_i32 = arith.constant 0 : i32
    %c0_i32_0 = arith.constant 0 : i32
    %c0_i32_1 = arith.constant 0 : i32
    return %c0_i32, %c0_i32_0 : i32, i32
  }
  func.func @transform_3(%arg0: i32) -> (i32, i32) {
    %c0_i32 = arith.constant 0 : i32
    %c0_i32_0 = arith.constant 0 : i32
    return %arg0, %c0_i32 : i32, i32
  }
}

</mosaic_0001>

<llo_original>
// kernel: tpu_custom_call.1
$region0: #{tpu_custom_call.1}
  #allocation0 [shape = 'u32[]', space=smem, size = 0x4, offset = 0x4, fixed_abs, tag = 'smem constant byte address 0x4 - core index']
  #allocation1 [shape = 'u32[144,128]{1,0:T(1,128)}', space=vmem, size = 0x12000, scoped, tag = 'internal scratch']
  %s0 = inlined_call_operand.hbm [shape: bf16[256,128], index: 0, kind: input, shape index: {}]
  %s1 = inlined_call_operand.vmem [shape: bf16[32,128], index: 1, kind: input, shape index: {}]
  %s2 = inlined_call_operand.vmem [shape: bf16[128,32], index: 2, kind: input, shape index: {}]
  %s3 = inlined_call_operand.hbm [shape: f32[256,128], index: 3, kind: output, shape index: {}]
  %s4 = sld [smem:[#allocation0]]
  $region49: #{tpu_custom_call.1} parent=0
    _
  %s6 = ssub.s32 1, %s4
  %s7 = scalar_select 0, %s6, %s4
  $region1: #{tpu_custom_call.1} parent=0
    #allocation2 [shape = 'u8[65536]{0}', space=vmem, size = 0x10000, scoped, tag = 'input window, operand 0']
    #allocation3 [shape = 's32[2]{0}', space=sflag, size = 0x8, scoped, tag = 'scoped memory for tpu_custom_call.1']
    #allocation4 [shape = 's32[2]{0}', space=sflag, size = 0x8, scoped, tag = 'scoped memory for tpu_custom_call.1']
    #allocation5 [shape = 'u8[131072]{0}', space=vmem, size = 0x20000, scoped, tag = 'output window, operand 0']
    %8 = vsyncpa [#allocation3], 0
    %s9 = scalar_lea.sflag [#allocation3], 1
    %10 = vsyncpa %s9, 0
    %11 = vsyncpa [#allocation4], 0
    %s12 = scalar_lea.sflag [#allocation4], 1
    %13 = vsyncpa %s12, 0
    loop: start=0, step=1, limit=4
    $region2: #{tpu_custom_call.1} parent=1 // loop_pre_header
      _
    $region3: #{tpu_custom_call.1} parent=1 // loop_header
      %s15 = sphi 0, %s19
      %p16 = scmp.ge.s32.totalorder %s15, 4
      %s25 = sphi 0, %s27
      %s28 = sphi 0, %s25
      %s29 = sphi 0, %s28
      %s45 = sphi 0, %s29
      %s49 = sphi 0, %s49
      %s51 = sphi 0, %s49
      %s52 = sphi 0, %s51
      %s66 = sphi 0, %s52
      %s70 = sphi 0, %s70
      %s72 = sphi 0, %s70
      %s73 = sphi 0, %s72
      %s87 = sphi 0, %s73
      %s93 = sphi 0, %s95
      %s96 = sphi 0, %s93
      %s97 = sphi 0, %s96
      %s113 = sphi 0, %s97
    $region4: #{tpu_custom_call.1} parent=1 // loop_header_branch
      %18 = sbr.rel (%p16) target = $region8
    $region5: #{tpu_custom_call.1} parent=1 // loop_body
      %s20 = ssub.s32 %s15, 1
      %s21 = ssub.s32 %s15, 2
      %s22 = sadd.s32 %s15, 1
      %s23 = ssub.s32 %s15, %s22
      %p24 = scmp.eq.s32.totalorder %s23, 0
      %s26 = sadd.s32 %s25, 1
      %s27 = scalar_select %p24, %s25, %s26
      %p30 = pneg %p24
      %p31 = scmp.eq.s32.totalorder %s15, 1
      %p32 = por %p30, %p31
      %p33 = scmp.ne.s32.totalorder %s25, %s28
      %p34 = scmp.eq.s32.totalorder %s15, 0
      %p35 = por %p33, %p34
      %p36 = scmp.ne.s32.totalorder %s25, %s28
      %p37 = scmp.eq.s32.totalorder %s20, 1
      %p38 = por %p36, %p37
      %p39 = scmp.ne.s32.totalorder %s28, %s29
      %p40 = scmp.eq.s32.totalorder %s20, 0
      %p41 = por %p39, %p40
      %p42 = scmp.ne.s32.totalorder %s28, %s29
      %p43 = scmp.eq.s32.totalorder %s21, 1
      %p44 = por %p42, %p43
      %p46 = scmp.ne.s32.totalorder %s29, %s45
      %p47 = scmp.eq.s32.totalorder %s21, 0
      %p48 = por %p46, %p47
      %s50 = sadd.s32 %s49, 1
      %p53 = scmp.eq.s32.totalorder %s15, 1
      %p54 = scmp.ne.s32.totalorder %s49, %s51
      %p55 = scmp.eq.s32.totalorder %s15, 0
      %p56 = por %p54, %p55
      %p57 = scmp.ne.s32.totalorder %s49, %s51
      %p58 = scmp.eq.s32.totalorder %s20, 1
      %p59 = por %p57, %p58
      %p60 = scmp.ne.s32.totalorder %s51, %s52
      %p61 = scmp.eq.s32.totalorder %s20, 0
      %p62 = por %p60, %p61
      %p63 = scmp.ne.s32.totalorder %s51, %s52
      %p64 = scmp.eq.s32.totalorder %s21, 1
      %p65 = por %p63, %p64
      %p67 = scmp.ne.s32.totalorder %s52, %s66
      %p68 = scmp.eq.s32.totalorder %s21, 0
      %p69 = por %p67, %p68
      %s71 = sadd.s32 %s70, 1
      %p74 = scmp.eq.s32.totalorder %s15, 1
      %p75 = scmp.ne.s32.totalorder %s70, %s72
      %p76 = scmp.eq.s32.totalorder %s15, 0
      %p77 = por %p75, %p76
      %p78 = scmp.ne.s32.totalorder %s70, %s72
      %p79 = scmp.eq.s32.totalorder %s20, 1
      %p80 = por %p78, %p79
      %p81 = scmp.ne.s32.totalorder %s72, %s73
      %p82 = scmp.eq.s32.totalorder %s20, 0
      %p83 = por %p81, %p82
      %p84 = scmp.ne.s32.totalorder %s72, %s73
      %p85 = scmp.eq.s32.totalorder %s21, 1
      %p86 = por %p84, %p85
      %p88 = scmp.ne.s32.totalorder %s73, %s87
      %p89 = scmp.eq.s32.totalorder %s21, 0
      %p90 = por %p88, %p89
      %s91 = ssub.s32 %s15, %s22
      %p92 = scmp.eq.s32.totalorder %s91, 0
      %s94 = sadd.s32 %s93, 1
      %s95 = scalar_select %p92, %s93, %s94
      %p98 = pneg %p92
      %p99 = scmp.eq.s32.totalorder %s15, 1
      %p100 = por %p98, %p99
      %p101 = scmp.ne.s32.totalorder %s93, %s96
      %p102 = scmp.eq.s32.totalorder %s15, 0
      %p103 = por %p101, %p102
      %p104 = scmp.ne.s32.totalorder %s93, %s96
      %p105 = scmp.eq.s32.totalorder %s20, 1
      %p106 = por %p104, %p105
      %p107 = scmp.ne.s32.totalorder %s96, %s97
      %p108 = scmp.eq.s32.totalorder %s20, 0
      %p109 = por %p107, %p108
      %p110 = scmp.ne.s32.totalorder %s96, %s97
      %p111 = scmp.eq.s32.totalorder %s21, 1
      %p112 = por %p110, %p111
      %p114 = scmp.ne.s32.totalorder %s97, %s113
      %p115 = scmp.eq.s32.totalorder %s21, 0
      %p116 = por %p114, %p115
      %p117 = scmp.le.s32.totalorder 1, %s15
      %p118 = scmp.lt.s32.totalorder %s15, 3
      %p119 = pnand %p117, %p118
      %p120 = pneg %p119
      // Predicated region
      $region9: #{tpu_custom_call.1} parent=5 // pred_check
        _
      $region10: #{tpu_custom_call.1} parent=5 // pred_check_branch
        %122 = sbr.rel (%p119) target = $region12
      $region11: #{tpu_custom_call.1} parent=5 // pred_region
        %s123 = ssub.s32 %s15, 1
        // Predicated region
        $region13: #{tpu_custom_call.1} parent=11 // pred_check
          %p124 = pneg %p62
        $region14: #{tpu_custom_call.1} parent=11 // pred_check_branch
          %126 = sbr.rel (%p124) target = $region16
        $region15: #{tpu_custom_call.1} parent=11 // pred_region
          _
        $region16: #{tpu_custom_call.1} parent=11 // pred_fallthru
          _
        // Predicated region
        $region17: #{tpu_custom_call.1} parent=11 // pred_check
          %p127 = pneg %p83
        $region18: #{tpu_custom_call.1} parent=11 // pred_check_branch
          %129 = sbr.rel (%p127) target = $region20
        $region19: #{tpu_custom_call.1} parent=11 // pred_region
          _
        $region20: #{tpu_custom_call.1} parent=11 // pred_fallthru
          _
      $region12: #{tpu_custom_call.1} parent=5 // pred_fallthru
        _
      %p130 = scmp.lt.s32.totalorder %s15, 2
      // Predicated region
      $region21: #{tpu_custom_call.1} parent=5 // pred_check
        %p131 = pneg %p130
      $region22: #{tpu_custom_call.1} parent=5 // pred_check_branch
        %133 = sbr.rel (%p131) target = $region24
      $region23: #{tpu_custom_call.1} parent=5 // pred_region
        // Predicated region
        $region25: #{tpu_custom_call.1} parent=23 // pred_check
          %p134 = pneg %p35
        $region26: #{tpu_custom_call.1} parent=23 // pred_check_branch
          %136 = sbr.rel (%p134) target = $region28
        $region27: #{tpu_custom_call.1} parent=23 // pred_region
          %s137 = sand.u32 %s25, 1
          %s138 = scalar_lea.sflag [#allocation3], %s137
          %s139 = sand.u32 %s25, 1
          %s140 = smul.addr %s139, 64
          %s141 = scalar_lea.vmem [#allocation2], %s140
          %s142 = smul.u32 16, %s15
          %s144 = ssub.s32 1024, 1024
          %145 = vsyncadd %s138, %s144
          %s146 = smul.addr %s142, 64
          %s147 = scalar_lea.hbm %s0, %s146
          %s148 = sshll.u32 %s141, 4
          %s149 = int_to_ptr.vmem [resolvable:$true] %s148
          %154 = dma.hbm_to_vmem [thread:$0]  %s147, 1024, %s149, %s138, 64, 64, 4
        $region28: #{tpu_custom_call.1} parent=23 // pred_fallthru
          _
      $region24: #{tpu_custom_call.1} parent=5 // pred_fallthru
        _
      %p155 = scmp.le.s32.totalorder 1, %s15
      %p156 = scmp.lt.s32.totalorder %s15, 3
      %p157 = pnand %p155, %p156
      %p158 = pneg %p157
      // Predicated region
      $region29: #{tpu_custom_call.1} parent=5 // pred_check
        _
      $region30: #{tpu_custom_call.1} parent=5 // pred_check_branch
        %160 = sbr.rel (%p157) target = $region32
      $region31: #{tpu_custom_call.1} parent=5 // pred_region
        %s161 = ssub.s32 %s15, 1
        %s162 = sand.u32 %s28, 1
        %s163 = scalar_lea.sflag [#allocation3], %s162
        %s164 = sand.u32 %s28, 1
        %s165 = smul.addr %s164, 64
        %s166 = scalar_lea.vmem [#allocation2], %s165
        // Predicated region
        $region33: #{tpu_custom_call.1} parent=31 // pred_check
          %p167 = pneg %p41
        $region34: #{tpu_custom_call.1} parent=31 // pred_check_branch
          %169 = sbr.rel (%p167) target = $region36
        $region35: #{tpu_custom_call.1} parent=31 // pred_region
          %170 = dma.done %s163, 1024
        $region36: #{tpu_custom_call.1} parent=31 // pred_fallthru
          _
        %s171 = sand.u32 %s28, 1
        %s172 = scalar_lea.sflag [#allocation3], %s171
        %s173 = sand.u32 %s28, 1
        %s174 = smul.addr %s173, 64
        %s175 = scalar_lea.vmem [#allocation2], %s174
        %p176 = pneg %p41
        %p177 = pneg %p38
        %p178 = pneg %p62
        %p179 = pneg %p59
        %p180 = pneg %p83
        %p181 = pneg %p80
        %p182 = pneg %p109
        %p183 = pneg %p106
        %s184 = sand.u32 %s96, 1
        %s185 = scalar_lea.sflag [#allocation4], %s184
        %s186 = sand.u32 %s96, 1
        %s187 = smul.addr %s186, 128
        %s188 = scalar_lea.vmem [#allocation5], %s187
        %s189 = smul.u32 16, %s20
        %s190 = smul.u32 16, %s20
        %v192 = vld [vmem:[%s166] sm:$0xf]
        %v193 = vld [vmem:[%s166 + $0x4] sm:$0xf]
        %v194 = vld [vmem:[%s166 + $0x8] sm:$0xf]
        %v195 = vld [vmem:[%s166 + $0xc] sm:$0xf]
        %v196 = vld [vmem:[%s166 + $0x10] sm:$0xf]
        %v197 = vld [vmem:[%s166 + $0x14] sm:$0xf]
        %v198 = vld [vmem:[%s166 + $0x18] sm:$0xf]
        %v199 = vld [vmem:[%s166 + $0x1c] sm:$0xf]
        %v200 = vld [vmem:[%s166 + $0x20] sm:$0xf]
        %v201 = vld [vmem:[%s166 + $0x24] sm:$0xf]
        %v202 = vld [vmem:[%s166 + $0x28] sm:$0xf]
        %v203 = vld [vmem:[%s166 + $0x2c] sm:$0xf]
        %v204 = vld [vmem:[%s166 + $0x30] sm:$0xf]
        %v205 = vld [vmem:[%s166 + $0x34] sm:$0xf]
        %v206 = vld [vmem:[%s166 + $0x38] sm:$0xf]
        %v207 = vld [vmem:[%s166 + $0x3c] sm:$0xf]
        %v208 = vld [vmem:[%s1] sm:$0xf]
        %v209 = vld [vmem:[%s1 + $0x4] sm:$0xf]
        %v210 = vld [vmem:[%s1 + $0x8] sm:$0xf]
        %v211 = vld [vmem:[%s1 + $0xc] sm:$0xf]
        %v228 = vunpack.c.l.b16 %v192
        %v229 = vunpack.c.l.b16 %v193
        %v230 = vunpack.c.l.b16 %v194
        %v231 = vunpack.c.l.b16 %v195
        %v232 = vunpack.c.l.b16 %v196
        %v233 = vunpack.c.l.b16 %v197
        %v234 = vunpack.c.l.b16 %v198
        %v235 = vunpack.c.l.b16 %v199
        %v236 = vunpack.c.l.b16 %v200
        %v237 = vunpack.c.l.b16 %v201
        %v238 = vunpack.c.l.b16 %v202
        %v239 = vunpack.c.l.b16 %v203
        %v240 = vunpack.c.l.b16 %v204
        %v241 = vunpack.c.l.b16 %v205
        %v242 = vunpack.c.l.b16 %v206
        %v243 = vunpack.c.l.b16 %v207
        %v244 = vpack.c.b16 %v229, %v228
        %v245 = vpack.c.b16 %v231, %v230
        %v246 = vpack.c.b16 %v233, %v232
        %v247 = vpack.c.b16 %v235, %v234
        %v248 = vpack.c.b16 %v237, %v236
        %v249 = vpack.c.b16 %v239, %v238
        %v250 = vpack.c.b16 %v241, %v240
        %v251 = vpack.c.b16 %v243, %v242
        %v264 = vunpack.c.l.b16 %v208
        %v265 = vunpack.c.l.b16 %v209
        %v266 = vunpack.c.l.b16 %v210
        %v267 = vunpack.c.l.b16 %v211
        %v268 = vpack.c.b16 %v265, %v264
        %v269 = vpack.c.b16 %v267, %v266
        %272 = vmatprep.subr.bf16.mxu0 0
        %273 = vmatpush1.bf16.xpose.msra.mxu0 0
        %274 = vmatprep.subr.bf16.mxu0 0
        %275 = vmatpush1.bf16.xpose.msra.mxu0 0
        %276 = vmatprep.subr.bf16.mxu0 0
        %277 = vmatpush1.bf16.xpose.msra.mxu0 0
        %278 = vmatprep.subr.bf16.mxu0 0
        %279 = vmatpush1.bf16.xpose.msra.mxu0 0
        %280 = vmatprep.subr.bf16.mxu0 0
        %281 = vmatpush1.bf16.xpose.msra.mxu0 0
        %282 = vmatprep.subr.bf16.mxu0 0
        %283 = vmatpush1.bf16.xpose.msra.mxu0 0
        %284 = vmatprep.subr.bf16.mxu0 0
        %285 = vmatpush1.bf16.xpose.msra.mxu0 %v269
        %286 = vmatprep.subr.bf16.mxu0 0
        %287 = vmatpush1.bf16.xpose.msra.mxu0 %v268
        %288 = vmatprep.subr.bf16.mxu0 0
        %289 = vmatpush2.bf16.xpose.msra.mxu0 0
        %290 = vmatprep.subr.bf16.mxu0 0
        %291 = vmatpush2.bf16.xpose.msra.mxu0 0
        %292 = vmatprep.subr.bf16.mxu0 0
        %293 = vmatpush2.bf16.xpose.msra.mxu0 0
        %294 = vmatprep.subr.bf16.mxu0 0
        %295 = vmatpush2.bf16.xpose.msra.mxu0 0
        %296 = vmatprep.subr.bf16.mxu0 0
        %297 = vmatpush2.bf16.xpose.msra.mxu0 0
        %298 = vmatprep.subr.bf16.mxu0 0
        %299 = vmatpush2.bf16.xpose.msra.mxu0 0
        %300 = vmatprep.subr.bf16.mxu0 0
        %301 = vmatpush2.bf16.xpose.msra.mxu0 0
        %302 = vmatprep.subr.bf16.mxu0 0
        %303 = vmatpush2.bf16.xpose.msra.mxu0 0
        %304 = vmatprep.mubr.bf16.mxu0 0
        %305 = vmatmul.mubr.bf16.gmra.mxu0 %v244
        %v306 = vpop.f32.mrf.mxu0
        %v307 = vadd.f32 0.0, %v306
        %v308 = vpop.f32.mrf.mxu0
        %v309 = vpop.f32.mrf.mxu0
        %v310 = vadd.f32 0.0, %v309
        %v311 = vpop.f32.mrf.mxu0
        %312 = vmatprep.mubr.bf16.mxu0 0
        %313 = vmatmul.mubr.bf16.gmra.mxu0 %v245
        %v314 = vpop.f32.mrf.mxu0
        %v315 = vadd.f32 0.0, %v314
        %v316 = vpop.f32.mrf.mxu0
        %v317 = vpop.f32.mrf.mxu0
        %v318 = vadd.f32 0.0, %v317
        %v319 = vpop.f32.mrf.mxu0
        %320 = vmatprep.mubr.bf16.mxu0 0
        %321 = vmatmul.mubr.bf16.gmra.mxu0 %v246
        %v322 = vpop.f32.mrf.mxu0
        %v323 = vadd.f32 0.0, %v322
        %v324 = vpop.f32.mrf.mxu0
        %v325 = vpop.f32.mrf.mxu0
        %v326 = vadd.f32 0.0, %v325
        %v327 = vpop.f32.mrf.mxu0
        %328 = vmatprep.mubr.bf16.mxu0 0
        %329 = vmatmul.mubr.bf16.gmra.mxu0 %v247
        %v330 = vpop.f32.mrf.mxu0
        %v331 = vadd.f32 0.0, %v330
        %v332 = vpop.f32.mrf.mxu0
        %v333 = vpop.f32.mrf.mxu0
        %v334 = vadd.f32 0.0, %v333
        %v335 = vpop.f32.mrf.mxu0
        %336 = vmatprep.mubr.bf16.mxu0 0
        %337 = vmatmul.mubr.bf16.gmra.mxu0 %v248
        %v338 = vpop.f32.mrf.mxu0
        %v339 = vadd.f32 0.0, %v338
        %v340 = vpop.f32.mrf.mxu0
        %v341 = vpop.f32.mrf.mxu0
        %v342 = vadd.f32 0.0, %v341
        %v343 = vpop.f32.mrf.mxu0
        %344 = vmatprep.mubr.bf16.mxu0 0
        %345 = vmatmul.mubr.bf16.gmra.mxu0 %v249
        %v346 = vpop.f32.mrf.mxu0
        %v347 = vadd.f32 0.0, %v346
        %v348 = vpop.f32.mrf.mxu0
        %v349 = vpop.f32.mrf.mxu0
        %v350 = vadd.f32 0.0, %v349
        %v351 = vpop.f32.mrf.mxu0
        %352 = vmatprep.mubr.bf16.mxu0 0
        %353 = vmatmul.mubr.bf16.gmra.mxu0 %v250
        %v354 = vpop.f32.mrf.mxu0
        %v355 = vadd.f32 0.0, %v354
        %v356 = vpop.f32.mrf.mxu0
        %v357 = vpop.f32.mrf.mxu0
        %v358 = vadd.f32 0.0, %v357
        %v359 = vpop.f32.mrf.mxu0
        %360 = vmatprep.mubr.bf16.mxu0 0
        %361 = vmatmul.mubr.bf16.gmra.mxu0 %v251
        %v362 = vpop.f32.mrf.mxu0
        %v363 = vadd.f32 0.0, %v362
        %v364 = vpop.f32.mrf.mxu0
        %v365 = vpop.f32.mrf.mxu0
        %v366 = vadd.f32 0.0, %v365
        %v367 = vpop.f32.mrf.mxu0
        %368 = vdwg.mxu0
        %v369 = vmax.f32 %v307, 0.0
        %v370 = vmax.f32 %v310, 0.0
        %v371 = vmax.f32 %v315, 0.0
        %v372 = vmax.f32 %v318, 0.0
        %v373 = vmax.f32 %v323, 0.0
        %v374 = vmax.f32 %v326, 0.0
        %v375 = vmax.f32 %v331, 0.0
        %v376 = vmax.f32 %v334, 0.0
        %v377 = vmax.f32 %v339, 0.0
        %v378 = vmax.f32 %v342, 0.0
        %v379 = vmax.f32 %v347, 0.0
        %v380 = vmax.f32 %v350, 0.0
        %v381 = vmax.f32 %v355, 0.0
        %v382 = vmax.f32 %v358, 0.0
        %v383 = vmax.f32 %v363, 0.0
        %v384 = vmax.f32 %v366, 0.0
        %v385 = vpack.c.bf16 %v370, %v369
        %v386 = vpack.c.bf16 %v372, %v371
        %v387 = vpack.c.bf16 %v374, %v373
        %v388 = vpack.c.bf16 %v376, %v375
        %v389 = vpack.c.bf16 %v378, %v377
        %v390 = vpack.c.bf16 %v380, %v379
        %v391 = vpack.c.bf16 %v382, %v381
        %v392 = vpack.c.bf16 %v384, %v383
        %v393 = vld [vmem:[%s2] sm:$0xf]
        %v394 = vld [vmem:[%s2 + $0x4] sm:$0xf]
        %v395 = vld [vmem:[%s2 + $0x8] sm:$0xf]
        %v396 = vld [vmem:[%s2 + $0xc] sm:$0xf]
        %v397 = vld [vmem:[%s2 + $0x10] sm:$0xf]
        %v398 = vld [vmem:[%s2 + $0x14] sm:$0xf]
        %v399 = vld [vmem:[%s2 + $0x18] sm:$0xf]
        %v400 = vld [vmem:[%s2 + $0x1c] sm:$0xf]
        %v401 = vld [vmem:[%s2 + $0x20] sm:$0xf]
        %v402 = vld [vmem:[%s2 + $0x24] sm:$0xf]
        %v403 = vld [vmem:[%s2 + $0x28] sm:$0xf]
        %v404 = vld [vmem:[%s2 + $0x2c] sm:$0xf]
        %v405 = vld [vmem:[%s2 + $0x30] sm:$0xf]
        %v406 = vld [vmem:[%s2 + $0x34] sm:$0xf]
        %v407 = vld [vmem:[%s2 + $0x38] sm:$0xf]
        %v408 = vld [vmem:[%s2 + $0x3c] sm:$0xf]
        %v425 = vunpack.c.l.b16 %v393
        %v426 = vunpack.c.l.b16 %v394
        %v427 = vunpack.c.l.b16 %v395
        %v428 = vunpack.c.l.b16 %v396
        %v429 = vunpack.c.l.b16 %v397
        %v430 = vunpack.c.l.b16 %v398
        %v431 = vunpack.c.l.b16 %v399
        %v432 = vunpack.c.l.b16 %v400
        %v433 = vunpack.c.l.b16 %v401
        %v434 = vunpack.c.l.b16 %v402
        %v435 = vunpack.c.l.b16 %v403
        %v436 = vunpack.c.l.b16 %v404
        %v437 = vunpack.c.l.b16 %v405
        %v438 = vunpack.c.l.b16 %v406
        %v439 = vunpack.c.l.b16 %v407
        %v440 = vunpack.c.l.b16 %v408
        %v441 = vpack.c.b16 %v426, %v425
        %v442 = vpack.c.b16 %v428, %v427
        %v443 = vpack.c.b16 %v430, %v429
        %v444 = vpack.c.b16 %v432, %v431
        %v445 = vpack.c.b16 %v434, %v433
        %v446 = vpack.c.b16 %v436, %v435
        %v447 = vpack.c.b16 %v438, %v437
        %v448 = vpack.c.b16 %v440, %v439
        %vm449 = vcmask 261120
        %v451 = vsel %vm449, %v385, 0
        %v454 = vsel %vm449, %v386, 0
        %v457 = vsel %vm449, %v387, 0
        %v460 = vsel %vm449, %v388, 0
        %v463 = vsel %vm449, %v389, 0
        %v466 = vsel %vm449, %v390, 0
        %v469 = vsel %vm449, %v391, 0
        %v472 = vsel %vm449, %v392, 0
        %v475 = vsel %vm449, %v441, 0
        %v478 = vsel %vm449, %v442, 0
        %v481 = vsel %vm449, %v443, 0
        %v484 = vsel %vm449, %v444, 0
        %v487 = vsel %vm449, %v445, 0
        %v490 = vsel %vm449, %v446, 0
        %v493 = vsel %vm449, %v447, 0
        %v496 = vsel %vm449, %v448, 0
        %498 = vmatprep.subr.bf16.mxu0 0
        %499 = vmatpush1.bf16.xpose.msra.mxu0 %v496
        %500 = vmatprep.subr.bf16.mxu0 0
        %501 = vmatpush1.bf16.xpose.msra.mxu0 %v493
        %502 = vmatprep.subr.bf16.mxu0 0
        %503 = vmatpush1.bf16.xpose.msra.mxu0 %v490
        %504 = vmatprep.subr.bf16.mxu0 0
        %505 = vmatpush1.bf16.xpose.msra.mxu0 %v487
        %506 = vmatprep.subr.bf16.mxu0 0
        %507 = vmatpush1.bf16.xpose.msra.mxu0 %v484
        %508 = vmatprep.subr.bf16.mxu0 0
        %509 = vmatpush1.bf16.xpose.msra.mxu0 %v481
        %510 = vmatprep.subr.bf16.mxu0 0
        %511 = vmatpush1.bf16.xpose.msra.mxu0 %v478
        %512 = vmatprep.subr.bf16.mxu0 0
        %513 = vmatpush1.bf16.xpose.msra.mxu0 %v475
        %514 = vmatprep.subr.bf16.mxu0 0
        %515 = vmatpush2.bf16.xpose.msra.mxu0 0
        %516 = vmatprep.subr.bf16.mxu0 0
        %517 = vmatpush2.bf16.xpose.msra.mxu0 0
        %518 = vmatprep.subr.bf16.mxu0 0
        %519 = vmatpush2.bf16.xpose.msra.mxu0 0
        %520 = vmatprep.subr.bf16.mxu0 0
        %521 = vmatpush2.bf16.xpose.msra.mxu0 0
        %522 = vmatprep.subr.bf16.mxu0 0
        %523 = vmatpush2.bf16.xpose.msra.mxu0 0
        %524 = vmatprep.subr.bf16.mxu0 0
        %525 = vmatpush2.bf16.xpose.msra.mxu0 0
        %526 = vmatprep.subr.bf16.mxu0 0
        %527 = vmatpush2.bf16.xpose.msra.mxu0 0
        %528 = vmatprep.subr.bf16.mxu0 0
        %529 = vmatpush2.bf16.xpose.msra.mxu0 0
        %530 = vmatprep.mubr.bf16.mxu0 0
        %531 = vmatmul.mubr.bf16.gmra.mxu0 %v451
        %v532 = vpop.f32.mrf.mxu0
        %v533 = vadd.f32 0.0, %v532
        %v534 = vpop.f32.mrf.mxu0
        %v535 = vpop.f32.mrf.mxu0
        %v536 = vadd.f32 0.0, %v535
        %v537 = vpop.f32.mrf.mxu0
        %538 = vmatprep.mubr.bf16.mxu0 0
        %539 = vmatmul.mubr.bf16.gmra.mxu0 %v454
        %v540 = vpop.f32.mrf.mxu0
        %v541 = vadd.f32 0.0, %v540
        %v542 = vpop.f32.mrf.mxu0
        %v543 = vpop.f32.mrf.mxu0
        %v544 = vadd.f32 0.0, %v543
        %v545 = vpop.f32.mrf.mxu0
        %546 = vmatprep.mubr.bf16.mxu0 0
        %547 = vmatmul.mubr.bf16.gmra.mxu0 %v457
        %v548 = vpop.f32.mrf.mxu0
        %v549 = vadd.f32 0.0, %v548
        %v550 = vpop.f32.mrf.mxu0
        %v551 = vpop.f32.mrf.mxu0
        %v552 = vadd.f32 0.0, %v551
        %v553 = vpop.f32.mrf.mxu0
        %554 = vmatprep.mubr.bf16.mxu0 0
        %555 = vmatmul.mubr.bf16.gmra.mxu0 %v460
        %v556 = vpop.f32.mrf.mxu0
        %v557 = vadd.f32 0.0, %v556
        %v558 = vpop.f32.mrf.mxu0
        %v559 = vpop.f32.mrf.mxu0
        %v560 = vadd.f32 0.0, %v559
        %v561 = vpop.f32.mrf.mxu0
        %562 = vmatprep.mubr.bf16.mxu0 0
        %563 = vmatmul.mubr.bf16.gmra.mxu0 %v463
        %v564 = vpop.f32.mrf.mxu0
        %v565 = vadd.f32 0.0, %v564
        %v566 = vpop.f32.mrf.mxu0
        %v567 = vpop.f32.mrf.mxu0
        %v568 = vadd.f32 0.0, %v567
        %v569 = vpop.f32.mrf.mxu0
        %570 = vmatprep.mubr.bf16.mxu0 0
        %571 = vmatmul.mubr.bf16.gmra.mxu0 %v466
        %v572 = vpop.f32.mrf.mxu0
        %v573 = vadd.f32 0.0, %v572
        %v574 = vpop.f32.mrf.mxu0
        %v575 = vpop.f32.mrf.mxu0
        %v576 = vadd.f32 0.0, %v575
        %v577 = vpop.f32.mrf.mxu0
        %578 = vmatprep.mubr.bf16.mxu0 0
        %579 = vmatmul.mubr.bf16.gmra.mxu0 %v469
        %v580 = vpop.f32.mrf.mxu0
        %v581 = vadd.f32 0.0, %v580
        %v582 = vpop.f32.mrf.mxu0
        %v583 = vpop.f32.mrf.mxu0
        %v584 = vadd.f32 0.0, %v583
        %v585 = vpop.f32.mrf.mxu0
        %586 = vmatprep.mubr.bf16.mxu0 0
        %587 = vmatmul.mubr.bf16.gmra.mxu0 %v472
        %v588 = vpop.f32.mrf.mxu0
        %v589 = vadd.f32 0.0, %v588
        %v590 = vpop.f32.mrf.mxu0
        %v591 = vpop.f32.mrf.mxu0
        %v592 = vadd.f32 0.0, %v591
        %v593 = vpop.f32.mrf.mxu0
        %594 = vdwg.mxu0
        %v595 = vmax.f32 %v533, 0.0
        %v596 = vmax.f32 %v536, 0.0
        %v597 = vmax.f32 %v541, 0.0
        %v598 = vmax.f32 %v544, 0.0
        %v599 = vmax.f32 %v549, 0.0
        %v600 = vmax.f32 %v552, 0.0
        %v601 = vmax.f32 %v557, 0.0
        %v602 = vmax.f32 %v560, 0.0
        %v603 = vmax.f32 %v565, 0.0
        %v604 = vmax.f32 %v568, 0.0
        %v605 = vmax.f32 %v573, 0.0
        %v606 = vmax.f32 %v576, 0.0
        %v607 = vmax.f32 %v581, 0.0
        %v608 = vmax.f32 %v584, 0.0
        %v609 = vmax.f32 %v589, 0.0
        %v610 = vmax.f32 %v592, 0.0
        %611 = vst [vmem:[%s188] sm:$0xff] %v595
        %612 = vst [vmem:[%s188 + $0x8] sm:$0xff] %v596
        %613 = vst [vmem:[%s188 + $0x10] sm:$0xff] %v597
        %614 = vst [vmem:[%s188 + $0x18] sm:$0xff] %v598
        %615 = vst [vmem:[%s188 + $0x20] sm:$0xff] %v599
        %616 = vst [vmem:[%s188 + $0x28] sm:$0xff] %v600
        %617 = vst [vmem:[%s188 + $0x30] sm:$0xff] %v601
        %618 = vst [vmem:[%s188 + $0x38] sm:$0xff] %v602
        %619 = vst [vmem:[%s188 + $0x40] sm:$0xff] %v603
        %620 = vst [vmem:[%s188 + $0x48] sm:$0xff] %v604
        %621 = vst [vmem:[%s188 + $0x50] sm:$0xff] %v605
        %622 = vst [vmem:[%s188 + $0x58] sm:$0xff] %v606
        %623 = vst [vmem:[%s188 + $0x60] sm:$0xff] %v607
        %624 = vst [vmem:[%s188 + $0x68] sm:$0xff] %v608
        %625 = vst [vmem:[%s188 + $0x70] sm:$0xff] %v609
        %626 = vst [vmem:[%s188 + $0x78] sm:$0xff] %v610
        %s627 = sand.u32 %s96, 1
        %s628 = scalar_lea.sflag [#allocation4], %s627
        %s629 = sand.u32 %s96, 1
        %s630 = smul.addr %s629, 128
        %s631 = scalar_lea.vmem [#allocation5], %s630
        // Predicated region
        $region37: #{tpu_custom_call.1} parent=31 // pred_check
          %p632 = pneg %p106
        $region38: #{tpu_custom_call.1} parent=31 // pred_check_branch
          %634 = sbr.rel (%p632) target = $region40
        $region39: #{tpu_custom_call.1} parent=31 // pred_region
          %s635 = smul.u32 16, %s20
          %s637 = ssub.s32 2048, 2048
          %638 = vsyncadd %s628, %s637
          %s639 = smul.addr %s635, 128
          %s640 = scalar_lea.hbm %s3, %s639
          %s641 = sshll.u32 %s631, 4
          %s642 = int_to_ptr.vmem [resolvable:$true] %s641
          %647 = dma.vmem_to_hbm [thread:$0]  %s642, 2048, %s640, %s628, 128, 128, 8
        $region40: #{tpu_custom_call.1} parent=31 // pred_fallthru
          _
      $region32: #{tpu_custom_call.1} parent=5 // pred_fallthru
        _
      %p648 = scmp.le.s32.totalorder 2, %s15
      // Predicated region
      $region41: #{tpu_custom_call.1} parent=5 // pred_check
        %p649 = pneg %p648
      $region42: #{tpu_custom_call.1} parent=5 // pred_check_branch
        %651 = sbr.rel (%p649) target = $region44
      $region43: #{tpu_custom_call.1} parent=5 // pred_region
        %s652 = ssub.s32 %s15, 2
        // Predicated region
        $region45: #{tpu_custom_call.1} parent=43 // pred_check
          %p653 = pneg %p112
        $region46: #{tpu_custom_call.1} parent=43 // pred_check_branch
          %655 = sbr.rel (%p653) target = $region48
        $region47: #{tpu_custom_call.1} parent=43 // pred_region
          %s656 = sand.u32 %s97, 1
          %s657 = scalar_lea.sflag [#allocation4], %s656
          %s658 = sand.u32 %s97, 1
          %s659 = smul.addr %s658, 128
          %s660 = scalar_lea.vmem [#allocation5], %s659
          %661 = dma.done %s657, 2048
        $region48: #{tpu_custom_call.1} parent=43 // pred_fallthru
          _
      $region44: #{tpu_custom_call.1} parent=5 // pred_fallthru
        _
    $region6: #{tpu_custom_call.1} parent=1 // loop_footer
      %s19 = sadd.s32 1, %s15
    $region7: #{tpu_custom_call.1} parent=1 // loop_footer_branch
      %14 = sbr.rel target = $region3
    $region8: #{tpu_custom_call.1} parent=1 // loop_exit
      _
    %662 = vsyncpa [#allocation3], 1
    %s663 = scalar_lea.sflag [#allocation3], 1
    %664 = vsyncpa %s663, 1
    %665 = vsyncpa [#allocation4], 1
    %s666 = scalar_lea.sflag [#allocation4], 1
    %667 = vsyncpa %s666, 1

</llo_original>
